<compile_context>
chip_gen: v7x
topology: tpu7x:2x2x1
jax: 0.10.0
libtpu: 0.0.40
codegen_flags: <defaults>
</compile_context>

<pallas_src>
import math
from functools import partial

import jax
import jax.numpy as jnp
from jax.experimental import pallas as pl
from jax.experimental.pallas import tpu as pltpu

EPS = 1e-5
_MIB = 1024 * 1024
_FUSED_COL_TILE_TARGET = 4 * _MIB          # f32 working-set target per fused column tile


def _tpu_vmem_bytes():
    # Chip-aware VMEM capacity (v5e/v6e: 128 MiB, v7x: 64 MiB per TensorCore).
    try:
        return int(pltpu.get_tpu_info().vmem_capacity_bytes)
    except Exception:
        return 64 * _MIB                   # conservative lower bound, safe everywhere


# ---------------------------------------------------------------------------
# Small in-kernel helpers for the lane-folded layout (k is a power of two).
#   x (M, C) reshaped to (M/k, k*C): column j holds channel j % C.
# ---------------------------------------------------------------------------
def _fold_groups(v, k):
    """(1, k*C) group-major -> (1, C), summing the k groups (log2(k) adds)."""
    while k > 1:
        half = v.shape[1] // 2
        v = v[:, :half] + v[:, half:]
        k //= 2
    return v


def _tile_groups(v, k):
    """(1, C) -> (1, k*C), repeating along lanes to match the folded layout."""
    while k > 1:
        v = jnp.concatenate([v, v], axis=1)
        k //= 2
    return v


# ---------------------------------------------------------------------------
# Fused path: whole (lane-folded) x resident per column tile.
#   1 HBM read + 1 HBM write of x; grid over column tiles is pipelined and
#   "parallel" (megacore sharding on v7x).
# ---------------------------------------------------------------------------
def _fused_kernel(x_ref, gamma_ref, beta_ref, o_ref, *, k, inv_n):
    x = x_ref[...].astype(jnp.float32)                       # (Mr, ct)
    s = jnp.sum(x, axis=0, keepdims=True)                    # (1, ct)
    mean = _tile_groups(_fold_groups(s, k) * inv_n, k)       # (1, ct) per-channel mean
    xc = x - mean
    ss = jnp.sum(xc * xc, axis=0, keepdims=True)
    var = _tile_groups(_fold_groups(ss, k) * inv_n, k)       # centered, biased
    scale = gamma_ref[...] * jax.lax.rsqrt(var + EPS)
    o_ref[...] = (xc * scale + beta_ref[...]).astype(o_ref.dtype)


def _fused_path(x2, gamma_full, beta_full, k, ct, n_rows_total, vmem_limit):
    Mr, Cr = x2.shape
    n_col = Cr // ct
    return pl.pallas_call(
        partial(_fused_kernel, k=k, inv_n=1.0 / n_rows_total),
        out_shape=jax.ShapeDtypeStruct((Mr, Cr), x2.dtype),
        grid=(n_col,),
        in_specs=[pl.BlockSpec((Mr, ct), lambda j: (0, j)),
                  pl.BlockSpec((1, ct), lambda j: (0, j)),
                  pl.BlockSpec((1, ct), lambda j: (0, j))],
        out_specs=pl.BlockSpec((Mr, ct), lambda j: (0, j)),
        compiler_params=pltpu.CompilerParams(
            dimension_semantics=("parallel",),
            vmem_limit_bytes=vmem_limit),
    )(x2, gamma_full, beta_full)


# ---------------------------------------------------------------------------
# Streaming path: pass 1 = per-column sum/sumsq, pass 2 = x*scale + shift.
# ---------------------------------------------------------------------------
def _stats_kernel(x_ref, sum_ref, sumsq_ref, *, rows_total, row_tile, steps,
                  needs_mask):
    c = pl.program_id(0)          # TensorCore-split axis ("parallel")
    s = pl.program_id(1)          # reduction steps within a core ("arbitrary")

    @pl.when(s == 0)
    def _():
        sum_ref[...] = jnp.zeros_like(sum_ref)
        sumsq_ref[...] = jnp.zeros_like(sumsq_ref)

    x = x_ref[...].astype(jnp.float32)
    if needs_mask:
        # Zero rows past the true extent (partial last tile / phantom tiles of
        # the 2-way core split); zeros do not perturb sum / sum-of-squares.
        t = c * steps + s
        valid = rows_total - t * row_tile
        row_ids = jax.lax.broadcasted_iota(jnp.int32, x.shape, 0)
        x = jnp.where(row_ids < valid, x, 0.0)

    sum_ref[...] += jnp.sum(x, axis=0, keepdims=True)[None]
    sumsq_ref[...] += jnp.sum(x * x, axis=0, keepdims=True)[None]


def _apply_kernel(x_ref, scale_ref, shift_ref, o_ref):
    # TODO(synk): for bf16 inputs a native-bf16 FMA (v6e/v7x) would halve the
    # f32 intermediate; kept in f32 for accuracy/portability (still mem-bound).
    x = x_ref[...].astype(jnp.float32)
    o_ref[...] = (x * scale_ref[...] + shift_ref[...]).astype(o_ref.dtype)


def _streaming_path(x2, x_tail, gamma2, beta2, k, n_rows_total, out_dtype,
                    stream_tile_bytes, vmem_limit):
    Mr, Cr = x2.shape
    C = gamma2.shape[1]
    itemsize = x2.dtype.itemsize
    pack = 8 * max(1, 4 // itemsize)          # sublane packing: 8 f32 / 16 bf16 / 32 i8

    if Mr <= pack:
        row_tile = Mr                          # full-extent block (always legal)
    else:
        target = max(pack, (stream_tile_bytes // (Cr * 4)) // pack * pack)
        row_tile = max(pack, min(target, (Mr // pack) * pack))

    n_tiles = pl.cdiv(Mr, row_tile)
    n_split = 2                                # lets v7x use both TensorCores for pass 1
    steps = pl.cdiv(n_tiles, n_split)
    needs_mask = (n_tiles * row_tile != Mr) or (n_split * steps != n_tiles)

    # Pass 1: per-column sum / sum-of-squares, one partial per core-split slot.
    sums, sumsqs = pl.pallas_call(
        partial(_stats_kernel, rows_total=Mr, row_tile=row_tile, steps=steps,
                needs_mask=needs_mask),
        out_shape=(jax.ShapeDtypeStruct((n_split, 1, Cr), jnp.float32),
                   jax.ShapeDtypeStruct((n_split, 1, Cr), jnp.float32)),
        grid=(n_split, steps),
        in_specs=[pl.BlockSpec(
            (row_tile, Cr),
            lambda c, s: (jnp.minimum(c * steps + s, n_tiles - 1), 0))],
        out_specs=(pl.BlockSpec((1, 1, Cr), lambda c, s: (c, 0, 0)),
                   pl.BlockSpec((1, 1, Cr), lambda c, s: (c, 0, 0))),
        compiler_params=pltpu.CompilerParams(
            dimension_semantics=("parallel", "arbitrary"),
            vmem_limit_bytes=vmem_limit),
    )(x2)

    # Fold core partials and lane groups back to per-channel stats (tiny, XLA),
    # add the (<k row) leftover contribution, and precompute scale/shift ONCE.
    ch_sum = jnp.sum(sums, axis=(0, 1)).reshape(k, C).sum(axis=0)
    ch_sumsq = jnp.sum(sumsqs, axis=(0, 1)).reshape(k, C).sum(axis=0)
    if x_tail is not None:
        xt = x_tail.astype(jnp.float32)
        ch_sum = ch_sum + jnp.sum(xt, axis=0)
        ch_sumsq = ch_sumsq + jnp.sum(xt * xt, axis=0)

    inv_n = 1.0 / n_rows_total
    mean = ch_sum * inv_n
    # TODO(synk): E[x^2]-E[x]^2 can cancel when |mean| >> std; a fully centered
    # (Welford / mean-shifted) variant would need an extra streaming pass.
    var = jnp.maximum(ch_sumsq * inv_n - mean * mean, 0.0)
    scale_c = gamma2[0] * jax.lax.rsqrt(var + EPS)           # (C,)
    shift_c = beta2[0] - mean * scale_c                      # (C,)
    scale = jnp.tile(scale_c, (k,)).reshape(1, Cr)
    shift = jnp.tile(shift_c, (k,)).reshape(1, Cr)

    # Pass 2: pure streaming FMA.  Output allocated at exactly (Mr, Cr); the
    # partial last block relies on Pallas masking OOB block writes (no pad /
    # trailing slice).  input_output_aliases skipped: x is a live, non-donated
    # caller buffer, so aliasing would just force an XLA copy.
    out2 = pl.pallas_call(
        _apply_kernel,
        out_shape=jax.ShapeDtypeStruct((Mr, Cr), out_dtype),
        grid=(n_tiles,),
        in_specs=[pl.BlockSpec((row_tile, Cr), lambda i: (i, 0)),
                  pl.BlockSpec((1, Cr), lambda i: (0, 0)),
                  pl.BlockSpec((1, Cr), lambda i: (0, 0))],
        out_specs=pl.BlockSpec((row_tile, Cr), lambda i: (i, 0)),
        compiler_params=pltpu.CompilerParams(
            dimension_semantics=("parallel",),
            vmem_limit_bytes=vmem_limit),
    )(x2, scale, shift)

    out_main = out2.reshape(Mr * k, C)
    if x_tail is None:
        return out_main
    out_tail = (x_tail.astype(jnp.float32) * scale_c + shift_c).astype(out_dtype)
    return jnp.concatenate([out_main, out_tail], axis=0)


def _jnp_bn(x, gamma2, beta2):
    # Degenerate tiny case (fewer rows than the lane-fold factor).
    x32 = x.astype(jnp.float32)
    mean = jnp.mean(x32, axis=0, keepdims=True)
    var = jnp.mean((x32 - mean) ** 2, axis=0, keepdims=True)
    return (gamma2 * (x32 - mean) * jax.lax.rsqrt(var + EPS) + beta2).astype(x.dtype)


# ---------------------------------------------------------------------------
# Public wrapper (matches GraphBatchNorm1d.forward, training mode).
# ---------------------------------------------------------------------------
def graph_batch_norm1d(x, gamma, beta, num_points=None, *,
                       max_fused_bytes=None, vmem_limit_bytes=None):
    """x: (M, C) with M = batch*num_points (or any M if num_points is None)."""
    M, C = x.shape
    if num_points is not None and M % num_points != 0:
        raise ValueError("rows must be divisible by num_points")

    gamma2 = gamma.reshape(1, C).astype(jnp.float32)
    beta2 = beta.reshape(1, C).astype(jnp.float32)
    # TODO(synk): running_mean/running_var tracking buffers are not updated.

    # Chip-aware budgets (v5e/v6e: 128 MiB VMEM -> big fused threshold, 4 MiB
    # stream tiles; v7x: 64 MiB VMEM -> capped threshold, 8 MiB stream tiles).
    vmem_cap = _tpu_vmem_bytes()
    if vmem_limit_bytes is None:
        vmem_limit_bytes = min(vmem_cap * 3 // 4, 112 * _MIB)
    if max_fused_bytes is None:
        max_fused_bytes = vmem_limit_bytes // 6   # ~3-4 f32 copies of the tile live
    stream_tile_bytes = 8 * _MIB if vmem_cap <= 64 * _MIB else 4 * _MIB

    # Lane folding: fold k rows into the lane axis so the last dim is a
    # multiple of 128 (lane-dense loads/stores); k is a power of two.
    k = 128 // math.gcd(C, 128)
    Mr, L = M // k, M % k
    Cr = k * C

    if Mr == 0:
        return _jnp_bn(x, gamma2, beta2)

    if L == 0:
        x2, x_tail = x.reshape(Mr, Cr), None         # free (contiguous) reshape
    else:
        # Keep the main body lane-dense (one slice copy, still far cheaper than
        # masked sub-128-lane streams); the <k leftover rows go via plain XLA.
        x2 = jax.lax.slice_in_dim(x, 0, Mr * k, axis=0).reshape(Mr, Cr)
        x_tail = jax.lax.slice_in_dim(x, Mr * k, M, axis=0)

    # Column tile for the fused path.  For folded layouts (k>1) the in-kernel
    # per-channel fold forces a single tile of width Cr = lcm(C, 128).
    if k > 1:
        ct = Cr
    else:
        ct = 128
        while (Cr % (ct * 2) == 0 and ct * 2 <= Cr // 2
               and Mr * (ct * 2) * 4 <= _FUSED_COL_TILE_TARGET):
            ct *= 2

    fused_ok = (L == 0) and (Mr * ct * 4 <= max_fused_bytes)
    if fused_ok:
        gamma_full = jnp.tile(gamma2, (1, k))
        beta_full = jnp.tile(beta2, (1, k))
        out2 = _fused_path(x2, gamma_full, beta_full, k, ct, M, vmem_limit_bytes)
        return out2.reshape(M, C)

    return _streaming_path(x2, x_tail, gamma2, beta2, k, M, x.dtype,
                           stream_tile_bytes, vmem_limit_bytes)


def _reference(x, gamma, beta):
    x32 = x.astype(jnp.float32)
    mean = jnp.mean(x32, axis=0, keepdims=True)
    var = jnp.mean((x32 - mean) ** 2, axis=0, keepdims=True)
    return (gamma[None, :] * (x32 - mean) * jax.lax.rsqrt(var + EPS)
            + beta[None, :]).astype(x.dtype)


if __name__ == "__main__":
    key = jax.random.PRNGKey(0)
    k_x, k_g, k_b, k_x2 = jax.random.split(key, 4)

    batch, num_points, in_channels = 2, 8, 32
    M = batch * num_points

    # Input as the module receives it: (batch*num_points, in_channels).
    x = jax.random.normal(k_x, (M, in_channels), dtype=jnp.float32)
    gamma = 1.0 + 0.1 * jax.random.normal(k_g, (in_channels,), dtype=jnp.float32)
    beta = 0.1 * jax.random.normal(k_b, (in_channels,), dtype=jnp.float32)

    ref = _reference(x, gamma, beta)

    # Fused (VMEM-resident, lane-folded, column-tiled) path.
    out_fused = jax.block_until_ready(
        graph_batch_norm1d(x, gamma, beta, num_points))
    assert out_fused.shape == (M, in_channels)
    assert jnp.max(jnp.abs(out_fused - ref)) < 1e-4, "fused path mismatch"

    # Streaming (two-pass, lane-dense, pad-free) path, forced on the same input.
    out_stream = jax.block_until_ready(
        graph_batch_norm1d(x, gamma, beta, num_points, max_fused_bytes=0))
    assert out_stream.shape == (M, in_channels)
    assert jnp.max(jnp.abs(out_stream - ref)) < 1e-4, "streaming path mismatch"

    # Leftover-row path (M not divisible by the lane-fold factor), num_points=None.
    M2 = 18
    xb = jax.random.normal(k_x2, (M2, in_channels), dtype=jnp.float32)
    ref2 = _reference(xb, gamma, beta)
    out_rem = jax.block_until_ready(graph_batch_norm1d(xb, gamma, beta, None))
    assert out_rem.shape == (M2, in_channels)
    assert jnp.max(jnp.abs(out_rem - ref2)) < 1e-4, "leftover-row path mismatch"

    print("KERNEL_OK")
</pallas_src>

<mosaic_0001>
module attributes {stable_mosaic.version = 11 : i64} {
  func.func @_fused_kernel(%arg0: i32, %arg1: memref<4x128xf32, #tpu.memory_space<vmem>>, %arg2: memref<1x128xf32, #tpu.memory_space<vmem>>, %arg3: memref<1x128xf32, #tpu.memory_space<vmem>>, %arg4: memref<4x128xf32, #tpu.memory_space<vmem>>) attributes {dimension_semantics = [#tpu.dimension_semantics<parallel>], iteration_bounds = array<i64: 1>, scalar_prefetch = 0 : i64, scratch_operands = 0 : i64, tpu.core_type = #tpu.core_type<tc>, window_params = [{transform_indices = @transform_0, window_bounds = array<i64: 4, 128>}, {transform_indices = @transform_1, window_bounds = array<i64: 1, 128>}, {transform_indices = @transform_2, window_bounds = array<i64: 1, 128>}, {transform_indices = @transform_3, window_bounds = array<i64: 4, 128>}]} {
    %c0 = arith.constant 0 : index
    %c0_0 = arith.constant 0 : index
    %0 = vector.load %arg1[%c0, %c0_0] : memref<4x128xf32, #tpu.memory_space<vmem>>, vector<4x128xf32>
    %cst = arith.constant dense<0.000000e+00> : vector<128xf32>
    %1 = vector.multi_reduction <add>, %0, %cst [0] : vector<4x128xf32> to vector<128xf32>
    %2 = vector.shape_cast %1 : vector<128xf32> to vector<1x128xf32>
    %3 = vector.extract_strided_slice %2 {offsets = [0, 0], sizes = [1, 64], strides = [1, 1]} : vector<1x128xf32> to vector<1x64xf32>
    %4 = vector.extract_strided_slice %2 {offsets = [0, 64], sizes = [1, 64], strides = [1, 1]} : vector<1x128xf32> to vector<1x64xf32>
    %5 = arith.addf %3, %4 : vector<1x64xf32>
    %6 = vector.extract_strided_slice %5 {offsets = [0, 0], sizes = [1, 32], strides = [1, 1]} : vector<1x64xf32> to vector<1x32xf32>
    %7 = vector.extract_strided_slice %5 {offsets = [0, 32], sizes = [1, 32], strides = [1, 1]} : vector<1x64xf32> to vector<1x32xf32>
    %8 = arith.addf %6, %7 : vector<1x32xf32>
    %cst_1 = arith.constant 6.250000e-02 : f32
    %9 = vector.broadcast %cst_1 : f32 to vector<1x32xf32>
    %10 = arith.mulf %8, %9 : vector<1x32xf32>
    %11 = tpu.concatenate %10, %10 in 1 : vector<1x32xf32>, vector<1x32xf32> -> vector<1x64xf32>
    %12 = tpu.concatenate %11, %11 in 1 : vector<1x64xf32>, vector<1x64xf32> -> vector<1x128xf32>
    %13 = vector.broadcast %12 : vector<1x128xf32> to vector<4x128xf32>
    %14 = arith.subf %0, %13 : vector<4x128xf32>
    %15 = arith.mulf %14, %14 : vector<4x128xf32>
    %cst_2 = arith.constant dense<0.000000e+00> : vector<128xf32>
    %16 = vector.multi_reduction <add>, %15, %cst_2 [0] : vector<4x128xf32> to vector<128xf32>
    %17 = vector.shape_cast %16 : vector<128xf32> to vector<1x128xf32>
    %18 = vector.extract_strided_slice %17 {offsets = [0, 0], sizes = [1, 64], strides = [1, 1]} : vector<1x128xf32> to vector<1x64xf32>
    %19 = vector.extract_strided_slice %17 {offsets = [0, 64], sizes = [1, 64], strides = [1, 1]} : vector<1x128xf32> to vector<1x64xf32>
    %20 = arith.addf %18, %19 : vector<1x64xf32>
    %21 = vector.extract_strided_slice %20 {offsets = [0, 0], sizes = [1, 32], strides = [1, 1]} : vector<1x64xf32> to vector<1x32xf32>
    %22 = vector.extract_strided_slice %20 {offsets = [0, 32], sizes = [1, 32], strides = [1, 1]} : vector<1x64xf32> to vector<1x32xf32>
    %23 = arith.addf %21, %22 : vector<1x32xf32>
    %cst_3 = arith.constant 6.250000e-02 : f32
    %24 = vector.broadcast %cst_3 : f32 to vector<1x32xf32>
    %25 = arith.mulf %23, %24 : vector<1x32xf32>
    %26 = tpu.concatenate %25, %25 in 1 : vector<1x32xf32>, vector<1x32xf32> -> vector<1x64xf32>
    %27 = tpu.concatenate %26, %26 in 1 : vector<1x64xf32>, vector<1x64xf32> -> vector<1x128xf32>
    %c0_4 = arith.constant 0 : index
    %c0_5 = arith.constant 0 : index
    %28 = vector.load %arg2[%c0_4, %c0_5] : memref<1x128xf32, #tpu.memory_space<vmem>>, vector<1x128xf32>
    %cst_6 = arith.constant 9.99999974E-6 : f32
    %29 = vector.broadcast %cst_6 : f32 to vector<1x128xf32>
    %30 = arith.addf %27, %29 : vector<1x128xf32>
    %31 = math.rsqrt %30 : vector<1x128xf32>
    %32 = arith.mulf %28, %31 : vector<1x128xf32>
    %33 = vector.broadcast %32 : vector<1x128xf32> to vector<4x128xf32>
    %34 = arith.mulf %14, %33 : vector<4x128xf32>
    %c0_7 = arith.constant 0 : index
    %c0_8 = arith.constant 0 : index
    %35 = vector.load %arg3[%c0_7, %c0_8] : memref<1x128xf32, #tpu.memory_space<vmem>>, vector<1x128xf32>
    %36 = vector.broadcast %35 : vector<1x128xf32> to vector<4x128xf32>
    %37 = arith.addf %34, %36 : vector<4x128xf32>
    %c0_9 = arith.constant 0 : index
    %c0_10 = arith.constant 0 : index
    %38 = vector.load %arg4[%c0_9, %c0_10] : memref<4x128xf32, #tpu.memory_space<vmem>>, vector<4x128xf32>
    tpu.vector_store %arg4[%c0_9, %c0_10], %37 {strides = array<i32>} : memref<4x128xf32, #tpu.memory_space<vmem>>, vector<4x128xf32>,
    return
  }
  func.func @transform_0(%arg0: i32) -> (i32, i32) {
    %c0_i32 = arith.constant 0 : i32
    %c0_i32_0 = arith.constant 0 : i32
    return %c0_i32, %arg0 : i32, i32
  }
  func.func @transform_1(%arg0: i32) -> (i32, i32) {
    %c0_i32 = arith.constant 0 : i32
    %c0_i32_0 = arith.constant 0 : i32
    return %c0_i32, %arg0 : i32, i32
  }
  func.func @transform_2(%arg0: i32) -> (i32, i32) {
    %c0_i32 = arith.constant 0 : i32
    %c0_i32_0 = arith.constant 0 : i32
    return %c0_i32, %arg0 : i32, i32
  }
  func.func @transform_3(%arg0: i32) -> (i32, i32) {
    %c0_i32 = arith.constant 0 : i32
    %c0_i32_0 = arith.constant 0 : i32
    return %c0_i32, %arg0 : i32, i32
  }
}

</mosaic_0001>

<llo_original>
// kernel: tpu_custom_call.1
$region0: #{tpu_custom_call.1}
  #allocation0 [shape = 'u32[]', space=smem, size = 0x4, offset = 0x4, fixed_abs, tag = 'smem constant byte address 0x4 - core index']
  #allocation1 [shape = 'u32[144,128]{1,0:T(1,128)}', space=vmem, size = 0x12000, scoped, tag = 'internal scratch']
  %s0 = inlined_call_operand.hbm [shape: f32[4,128], index: 0, kind: input, shape index: {}]
  %s1 = inlined_call_operand.vmem [shape: f32[1,128], index: 1, kind: input, shape index: {}]
  %s2 = inlined_call_operand.vmem [shape: f32[1,128], index: 2, kind: input, shape index: {}]
  %s3 = inlined_call_operand.hbm [shape: f32[4,128], index: 3, kind: output, shape index: {}]
  %s4 = sld [smem:[#allocation0]]
  $region26: #{tpu_custom_call.1} parent=0
    _
  %s6 = ssub.s32 1, %s4
  %s7 = scalar_select 0, %s6, %s4
  $region1: #{tpu_custom_call.1} parent=0
    #allocation2 [shape = 'u8[2048]{0}', space=vmem, size = 0x800, scoped, tag = 'input window, operand 0, single buffered']
    #allocation3 [shape = 's32[1]{0}', space=sflag, size = 0x4, scoped, tag = 'scoped memory for tpu_custom_call.1']
    #allocation4 [shape = 's32[1]{0}', space=sflag, size = 0x4, scoped, tag = 'scoped memory for tpu_custom_call.1']
    #allocation5 [shape = 'u8[2048]{0}', space=vmem, size = 0x800, scoped, tag = 'output window, operand 0, single buffered']
    %8 = vsyncpa [#allocation3], 0
    %9 = vsyncpa [#allocation4], 0
    // Predicated region
    $region2: #{tpu_custom_call.1} parent=1 // pred_check
      _
    $region3: #{tpu_custom_call.1} parent=1 // pred_check_branch
      %11 = sbr.rel (0) target = $region5
    $region4: #{tpu_custom_call.1} parent=1 // pred_region
      %s13 = ssub.s32 64, 64
      %14 = vsyncadd [#allocation3], %s13
      %s16 = sshll.u32 [#allocation2], 4
      %s17 = int_to_ptr.vmem [resolvable:$true] %s16
      %19 = dma.hbm_to_vmem [thread:$0]  %s0, 64, %s17, [#allocation3]
    $region5: #{tpu_custom_call.1} parent=1 // pred_fallthru
      _
    // Predicated region
    $region6: #{tpu_custom_call.1} parent=1 // pred_check
      _
    $region7: #{tpu_custom_call.1} parent=1 // pred_check_branch
      %21 = sbr.rel (0) target = $region9
    $region8: #{tpu_custom_call.1} parent=1 // pred_region
      _
    $region9: #{tpu_custom_call.1} parent=1 // pred_fallthru
      _
    // Predicated region
    $region10: #{tpu_custom_call.1} parent=1 // pred_check
      _
    $region11: #{tpu_custom_call.1} parent=1 // pred_check_branch
      %23 = sbr.rel (0) target = $region13
    $region12: #{tpu_custom_call.1} parent=1 // pred_region
      _
    $region13: #{tpu_custom_call.1} parent=1 // pred_fallthru
      _
    // Predicated region
    $region14: #{tpu_custom_call.1} parent=1 // pred_check
      _
    $region15: #{tpu_custom_call.1} parent=1 // pred_check_branch
      %25 = sbr.rel (0) target = $region17
    $region16: #{tpu_custom_call.1} parent=1 // pred_region
      %26 = dma.done [#allocation3], 64
    $region17: #{tpu_custom_call.1} parent=1 // pred_fallthru
      _
    %v27 = vld [vmem:[#allocation2] sm:$0xf]
    %vm28 = vcmask 1043456
    %v29 = vsel %vm28, %v27, 0.0
    %v30 = vrot.slane %v29, 4
    %v31 = vadd.f32 %v29, %v30
    %v32 = vrot.slane %v31, 2
    %v33 = vadd.f32 %v31, %v32
    %v34 = vrot.slane %v33, 1
    %v35 = vadd.f32 %v33, %v34
    %37 = vrot.lane.b32.xlu0 %v35, 64
    %v38 = vpop.permute.xlu0 %37
    %v40 = vadd.f32 %v35, %v38
    %42 = vrot.lane.b32.xlu0 %v40, 96
    %v43 = vpop.permute.xlu0 %42
    %v45 = vadd.f32 %v40, %v43
    %v46 = vmul.f32 %v45, 0.0625
    %48 = vrot.lane.b32.xlu0 %v46, 32
    %v49 = vpop.permute.xlu0 %48
    %vm51 = vcmask 261120
    %v52 = vsel %vm51, %v46, %v49
    %54 = vrot.lane.b32.xlu0 %v52, 64
    %v55 = vpop.permute.xlu0 %54
    %vm57 = vcmask 523264
    %v58 = vsel %vm57, %v52, %v55
    %v59 = vlaneseq
    %v60 = vshrl.u32 %v59, 7
    %v61 = vsub.s32 0, %v60
    %v62 = vrot.slane %v58, %v61
    %v63 = vsub.f32 %v27, %v62
    %v64 = vmul.f32 %v63, %v63
    %v65 = vsel %vm28, %v64, 0.0
    %v66 = vrot.slane %v65, 4
    %v67 = vadd.f32 %v65, %v66
    %v68 = vrot.slane %v67, 2
    %v69 = vadd.f32 %v67, %v68
    %v70 = vrot.slane %v69, 1
    %v71 = vadd.f32 %v69, %v70
    %73 = vrot.lane.b32.xlu0 %v71, 64
    %v74 = vpop.permute.xlu0 %73
    %v76 = vadd.f32 %v71, %v74
    %78 = vrot.lane.b32.xlu0 %v76, 96
    %v79 = vpop.permute.xlu0 %78
    %v81 = vadd.f32 %v76, %v79
    %v82 = vmul.f32 %v81, 0.0625
    %84 = vrot.lane.b32.xlu0 %v82, 32
    %v85 = vpop.permute.xlu0 %84
    %v87 = vsel %vm51, %v82, %v85
    %89 = vrot.lane.b32.xlu0 %v87, 64
    %v90 = vpop.permute.xlu0 %89
    %v92 = vsel %vm57, %v87, %v90
    %v93 = vld [vmem:[%s1] sm:$0x1]
    %v94 = vadd.f32 %v92, 1e-05
    %v95 = vrsqrt.pop %v94
    %v96 = vmul.f32 %v93, %v95
    %v98 = vlaneseq
    %v99 = vshrl.u32 %v98, 7
    %v100 = vsub.s32 0, %v99
    %v101 = vrot.slane %v96, %v100
    %v103 = vmul.f32 %v63, %v101
    %v104 = vld [vmem:[%s2] sm:$0x1]
    %v106 = vlaneseq
    %v107 = vshrl.u32 %v106, 7
    %v108 = vsub.s32 0, %v107
    %v109 = vrot.slane %v104, %v108
    %v111 = vadd.f32 %v103, %v109
    %112 = vst [vmem:[#allocation5] sm:$0xf] %v111
    // Predicated region
    $region18: #{tpu_custom_call.1} parent=1 // pred_check
      _
    $region19: #{tpu_custom_call.1} parent=1 // pred_check_branch
      %114 = sbr.rel (0) target = $region21
    $region20: #{tpu_custom_call.1} parent=1 // pred_region
      %s116 = ssub.s32 64, 64
      %117 = vsyncadd [#allocation4], %s116
      %s119 = sshll.u32 [#allocation5], 4
      %s120 = int_to_ptr.vmem [resolvable:$true] %s119
      %122 = dma.vmem_to_hbm [thread:$0]  %s120, 64, %s3, [#allocation4]
    $region21: #{tpu_custom_call.1} parent=1 // pred_fallthru
      _
    // Predicated region
    $region22: #{tpu_custom_call.1} parent=1 // pred_check
      _
    $region23: #{tpu_custom_call.1} parent=1 // pred_check_branch
      %124 = sbr.rel (0) target = $region25
    $region24: #{tpu_custom_call.1} parent=1 // pred_region
      %125 = dma.done [#allocation4], 64
    $region25: #{tpu_custom_call.1} parent=1 // pred_fallthru
      _
    %126 = vsyncpa [#allocation3], 1
    %127 = vsyncpa [#allocation4], 1

</llo_original>
